<compile_context>
chip_gen: v6e
topology: v6e:2x2x1
jax: 0.10.0
libtpu: 0.0.40
codegen_flags: <defaults>
</compile_context>

<pallas_src>
import functools
import math

import jax
import jax.numpy as jnp
from jax.experimental import pallas as pl
from jax.experimental.pallas import tpu as pltpu

LANE = 128     # lane width: feature dims padded to multiples of this
SUBLANE = 8    # f32 sublane height: batch padded to multiples of this


def _round_up(x, m):
    return (x + m - 1) // m * m


# ---------------------------------------------------------------------------
# Kernel
# ---------------------------------------------------------------------------
def _fused_mlp_kernel(*refs, group_sizes, total_layers):
    """o = L_last(...ReLU(L1(ReLU(L0(x))))...), ReLU after every layer but last.

    refs = (x_ref, w_stack_0, b_stack_0, ..., w_stack_{G-1}, b_stack_{G-1}, o_ref)
      x_ref      : f32  [B_pad, in_pad]
      w_stack_g  : bf16 [count_g, in_pad_g, out_pad_g]
      b_stack_g  : f32  [count_g, 1, out_pad_g]
      o_ref      : f32  [B_pad, out_pad]
    All shapes are lane/sublane padded by the wrapper; padding is zeros so the
    math is exact. MXU runs on bf16 operands with f32 accumulation; bias add
    and ReLU are done in f32.
    """
    x_ref = refs[0]
    o_ref = refs[-1]
    h = x_ref[...]                                   # f32
    layer = 0
    for g, count in enumerate(group_sizes):
        w_ref = refs[1 + 2 * g]
        b_ref = refs[2 + 2 * g]
        for l in range(count):                       # static unroll
            w = w_ref[l]                             # bf16 [in_pad, out_pad]
            b = b_ref[l]                             # f32  [1, out_pad]
            h = jnp.dot(h.astype(jnp.bfloat16), w,
                        preferred_element_type=jnp.float32) + b
            layer += 1
            if layer < total_layers:
                h = jnp.maximum(h, 0.0)              # ReLU on hidden layers only
    o_ref[...] = h.astype(o_ref.dtype)


# ---------------------------------------------------------------------------
# One-time parameter preparation (hoisted out of the per-call forward)
# ---------------------------------------------------------------------------
def prepare_linear_net_params(params, weight_dtype=jnp.bfloat16):
    """Pad / cast / stack the (W [in,out], b [1,out]) list once.

    Consecutive layers whose padded shapes match are stacked along a leading
    axis so the kernel sees few, large operands.
    """
    in_size = params[0][0].shape[0]
    out_size = params[-1][0].shape[1]
    num_layers = len(params)

    in_pad = _round_up(in_size, LANE)
    padded = []
    cur_in_pad = in_pad
    for (w, b) in params:
        fi, fo = w.shape
        fo_pad = _round_up(fo, LANE)
        w_p = (jnp.zeros((cur_in_pad, fo_pad), weight_dtype)
               .at[:fi, :fo].set(w.astype(weight_dtype)))
        b_p = (jnp.zeros((1, fo_pad), jnp.float32)
               .at[:, :fo].set(b.astype(jnp.float32)))
        padded.append((w_p, b_p))
        cur_in_pad = fo_pad
    out_pad = cur_in_pad

    # Group consecutive layers with identical padded weight shapes.
    groups = []
    i = 0
    while i < num_layers:
        shape = padded[i][0].shape
        j = i
        while j < num_layers and padded[j][0].shape == shape:
            j += 1
        w_stack = jnp.stack([padded[k][0] for k in range(i, j)], axis=0)
        b_stack = jnp.stack([padded[k][1] for k in range(i, j)], axis=0)
        groups.append((w_stack, b_stack))
        i = j

    return {
        "groups": tuple(groups),
        "in_size": in_size, "in_pad": in_pad,
        "out_size": out_size, "out_pad": out_pad,
        "num_layers": num_layers,
    }


# ---------------------------------------------------------------------------
# Forward
# ---------------------------------------------------------------------------
def linear_net_forward(x, prepared, unpad=True):
    """Fused forward for the whole LinearNet in a single pallas_call.

    x: [B, Din] (any float dtype); prepared: output of prepare_linear_net_params.
    """
    B, Din = x.shape
    assert Din == prepared["in_size"], "input feature size mismatch"
    in_pad = prepared["in_pad"]
    out_pad = prepared["out_pad"]
    B_pad = _round_up(B, SUBLANE)

    if (B, Din) == (B_pad, in_pad) and x.dtype == jnp.float32:
        x_p = x                                           # already padded/aligned
    else:
        x_p = (jnp.zeros((B_pad, in_pad), jnp.float32)
               .at[:B, :Din].set(x.astype(jnp.float32)))

    groups = prepared["groups"]
    group_sizes = tuple(int(w.shape[0]) for (w, _) in groups)
    flat_inputs = [x_p]
    for (w, b) in groups:
        flat_inputs.extend((w, b))

    # Blockless VMEM residency: no grid, no double-buffering, one DMA per ref.
    vmem_spec = pl.BlockSpec(memory_space=pltpu.MemorySpace.VMEM)

    # Raise the scoped-VMEM limit only when the resident footprint needs it
    # (v5e default is 16 MiB; v6e/v7x 32 MiB).
    resident_bytes = (sum(a.size * a.dtype.itemsize for a in flat_inputs)
                      + B_pad * out_pad * 4)
    call_kwargs = {}
    if resident_bytes > 12 * 1024 * 1024:
        call_kwargs["compiler_params"] = pltpu.CompilerParams(
            vmem_limit_bytes=int(min(2 * resident_bytes + (4 << 20), 100 << 20)))

    kernel = functools.partial(
        _fused_mlp_kernel,
        group_sizes=group_sizes,
        total_layers=prepared["num_layers"],
    )
    out_p = pl.pallas_call(
        kernel,
        out_shape=jax.ShapeDtypeStruct((B_pad, out_pad), jnp.float32),
        in_specs=[vmem_spec] * len(flat_inputs),
        out_specs=vmem_spec,
        **call_kwargs,
    )(*flat_inputs)

    if unpad:
        return out_p[:B, :prepared["out_size"]]
    return out_p   # lane-dense padded [B_pad, out_pad]; pad region is zero


# ---------------------------------------------------------------------------
# Init mirroring PyTorch nn.Linear defaults (U[-1/sqrt(fan_in), +1/sqrt(fan_in)])
# ---------------------------------------------------------------------------
def init_linear_net_params(key, input_size, num_hid_layers, layers_size,
                           output_size, hl_shape="const"):
    """Returns list of (W [in, out], b [1, out]) matching LinearNet's layer list."""
    dims = [(input_size, layers_size)]
    if hl_shape == "const":
        for _ in range(1, num_hid_layers):
            dims.append((layers_size, layers_size))
        dims.append((layers_size, output_size))
    elif hl_shape == "doubling":
        n = num_hid_layers + 1
        for i in range(1, n):
            dims.append((layers_size * i, layers_size * (i + 1)))
        dims.append((layers_size * n, output_size))
    else:
        raise ValueError(hl_shape)

    params = []
    for (fan_in, fan_out) in dims:
        key, kw, kb = jax.random.split(key, 3)
        bound = 1.0 / math.sqrt(fan_in)
        w = jax.random.uniform(kw, (fan_in, fan_out), jnp.float32, -bound, bound)
        b = jax.random.uniform(kb, (1, fan_out), jnp.float32, -bound, bound)
        params.append((w, b))
    return params


if __name__ == "__main__":
    # Small shapes consistent with the module: batch=8, input=32, 2 hidden
    # layers of width 32, output=16, 'const' hidden-layer shape, ReLU.
    batch = 8
    input_size = 32
    num_hid_layers = 2
    layers_size = 32
    output_size = 16

    key = jax.random.PRNGKey(0)
    key, kx = jax.random.split(key)
    x = jax.random.normal(kx, (batch, input_size), jnp.float32)

    params = init_linear_net_params(
        key, input_size, num_hid_layers, layers_size, output_size, hl_shape="const"
    )

    # One-time prep (padding / bf16 cast / stacking) hoisted out of the forward.
    prepared = prepare_linear_net_params(params)

    fwd = jax.jit(lambda inp: linear_net_forward(inp, prepared))
    out = fwd(x)
    out = jax.block_until_ready(out)

    # Reference doing the SAME bf16-operand / f32-accumulate math in plain JAX.
    ref = x.astype(jnp.float32)
    for i, (w, b) in enumerate(params):
        ref = jnp.dot(ref.astype(jnp.bfloat16), w.astype(jnp.bfloat16),
                      preferred_element_type=jnp.float32) + b
        if i < len(params) - 1:
            ref = jnp.maximum(ref, 0.0)

    assert out.shape == (batch, output_size)
    assert jnp.allclose(out, ref, atol=1e-3, rtol=1e-3)

    print("KERNEL_OK")
</pallas_src>

<mosaic_0001>
module attributes {stable_mosaic.version = 11 : i64} {
  func.func @_fused_mlp_kernel(%arg0: memref<8x128xf32, #tpu.memory_space<vmem>>, %arg1: memref<3x128x128xbf16, #tpu.memory_space<vmem>>, %arg2: memref<3x1x128xf32, #tpu.memory_space<vmem>>, %arg3: memref<8x128xf32, #tpu.memory_space<vmem>>) attributes {dimension_semantics = [], scalar_prefetch = 0 : i64, scratch_operands = 0 : i64, tpu.core_type = #tpu.core_type<tc>} {
    %c0 = arith.constant 0 : index
    %c0_0 = arith.constant 0 : index
    %0 = vector.load %arg0[%c0, %c0_0] : memref<8x128xf32, #tpu.memory_space<vmem>>, vector<8x128xf32>
    %c0_1 = arith.constant 0 : index
    %c0_2 = arith.constant 0 : index
    %c0_3 = arith.constant 0 : index
    %1 = vector.load %arg1[%c0_1, %c0_2, %c0_3] : memref<3x128x128xbf16, #tpu.memory_space<vmem>>, vector<1x128x128xbf16>
    %2 = vector.shape_cast %1 : vector<1x128x128xbf16> to vector<128x128xbf16>
    %c0_4 = arith.constant 0 : index
    %c0_5 = arith.constant 0 : index
    %c0_6 = arith.constant 0 : index
    %3 = vector.load %arg2[%c0_4, %c0_5, %c0_6] : memref<3x1x128xf32, #tpu.memory_space<vmem>>, vector<1x1x128xf32>
    %4 = vector.shape_cast %3 : vector<1x1x128xf32> to vector<1x128xf32>
    %5 = arith.truncf %0 : vector<8x128xf32> to vector<8x128xbf16>
    %cst = arith.constant dense<0.000000e+00> : vector<8x128xf32>
    %6 = tpu.matmul %5, %2, %cst {dimension_numbers = #tpu.dot_dimension_numbers<[1], [0], [0], [1], [0, 0, 1, 1], [], []>} : vector<8x128xbf16>, vector<128x128xbf16>, vector<8x128xf32> -> vector<8x128xf32>
    %7 = vector.broadcast %4 : vector<1x128xf32> to vector<8x128xf32>
    %8 = arith.addf %6, %7 : vector<8x128xf32>
    %cst_7 = arith.constant 0.000000e+00 : f32
    %9 = vector.broadcast %cst_7 : f32 to vector<8x128xf32>
    %10 = arith.maximumf %8, %9 : vector<8x128xf32>
    %c1 = arith.constant 1 : index
    %c0_8 = arith.constant 0 : index
    %c0_9 = arith.constant 0 : index
    %11 = vector.load %arg1[%c1, %c0_8, %c0_9] : memref<3x128x128xbf16, #tpu.memory_space<vmem>>, vector<1x128x128xbf16>
    %12 = vector.shape_cast %11 : vector<1x128x128xbf16> to vector<128x128xbf16>
    %c1_10 = arith.constant 1 : index
    %c0_11 = arith.constant 0 : index
    %c0_12 = arith.constant 0 : index
    %13 = vector.load %arg2[%c1_10, %c0_11, %c0_12] : memref<3x1x128xf32, #tpu.memory_space<vmem>>, vector<1x1x128xf32>
    %14 = vector.shape_cast %13 : vector<1x1x128xf32> to vector<1x128xf32>
    %15 = arith.truncf %10 : vector<8x128xf32> to vector<8x128xbf16>
    %cst_13 = arith.constant dense<0.000000e+00> : vector<8x128xf32>
    %16 = tpu.matmul %15, %12, %cst_13 {dimension_numbers = #tpu.dot_dimension_numbers<[1], [0], [0], [1], [0, 0, 1, 1], [], []>} : vector<8x128xbf16>, vector<128x128xbf16>, vector<8x128xf32> -> vector<8x128xf32>
    %17 = vector.broadcast %14 : vector<1x128xf32> to vector<8x128xf32>
    %18 = arith.addf %16, %17 : vector<8x128xf32>
    %cst_14 = arith.constant 0.000000e+00 : f32
    %19 = vector.broadcast %cst_14 : f32 to vector<8x128xf32>
    %20 = arith.maximumf %18, %19 : vector<8x128xf32>
    %c2 = arith.constant 2 : index
    %c0_15 = arith.constant 0 : index
    %c0_16 = arith.constant 0 : index
    %21 = vector.load %arg1[%c2, %c0_15, %c0_16] : memref<3x128x128xbf16, #tpu.memory_space<vmem>>, vector<1x128x128xbf16>
    %22 = vector.shape_cast %21 : vector<1x128x128xbf16> to vector<128x128xbf16>
    %c2_17 = arith.constant 2 : index
    %c0_18 = arith.constant 0 : index
    %c0_19 = arith.constant 0 : index
    %23 = vector.load %arg2[%c2_17, %c0_18, %c0_19] : memref<3x1x128xf32, #tpu.memory_space<vmem>>, vector<1x1x128xf32>
    %24 = vector.shape_cast %23 : vector<1x1x128xf32> to vector<1x128xf32>
    %25 = arith.truncf %20 : vector<8x128xf32> to vector<8x128xbf16>
    %cst_20 = arith.constant dense<0.000000e+00> : vector<8x128xf32>
    %26 = tpu.matmul %25, %22, %cst_20 {dimension_numbers = #tpu.dot_dimension_numbers<[1], [0], [0], [1], [0, 0, 1, 1], [], []>} : vector<8x128xbf16>, vector<128x128xbf16>, vector<8x128xf32> -> vector<8x128xf32>
    %27 = vector.broadcast %24 : vector<1x128xf32> to vector<8x128xf32>
    %28 = arith.addf %26, %27 : vector<8x128xf32>
    %c0_21 = arith.constant 0 : index
    %c0_22 = arith.constant 0 : index
    %29 = vector.load %arg3[%c0_21, %c0_22] : memref<8x128xf32, #tpu.memory_space<vmem>>, vector<8x128xf32>
    tpu.vector_store %arg3[%c0_21, %c0_22], %28 {strides = array<i32>} : memref<8x128xf32, #tpu.memory_space<vmem>>, vector<8x128xf32>,
    return
  }
}

</mosaic_0001>

<llo_original>
// kernel: _lambda_.1
$region0: #{_lambda_.1}
  #allocation0 [shape = 'u32[]', space=smem, size = 0x4, offset = 0x4, fixed_abs, tag = 'smem constant byte address 0x4 - core index']
  #allocation1 [shape = 'u32[144,128]{1,0:T(1,128)}', space=vmem, size = 0x12000, scoped, tag = 'internal scratch']
  %s0 = inlined_call_operand.vmem [shape: f32[8,128], index: 0, kind: input, shape index: {}]
  %s1 = inlined_call_operand.hbm [shape: bf16[3,128,128], index: 1, kind: input, shape index: {}]
  %s2 = inlined_call_operand.vmem [shape: f32[3,1,128], index: 2, kind: input, shape index: {}]
  %s3 = inlined_call_operand.hbm [shape: f32[8,128], index: 3, kind: output, shape index: {}]
  %s4 = sld [smem:[#allocation0]]
  $region26: #{_lambda_.1} parent=0
    _
  %s6 = ssub.s32 1, %s4
  %s7 = scalar_select 0, %s6, %s4
  $region1: #{_lambda_.1} parent=0
    #allocation2 [shape = 'u8[98304]{0}', space=vmem, size = 0x18000, scoped, tag = 'input window, operand 1, single buffered']
    #allocation3 [shape = 's32[1]{0}', space=sflag, size = 0x4, scoped, tag = 'scoped memory for _lambda_.1']
    #allocation4 [shape = 's32[1]{0}', space=sflag, size = 0x4, scoped, tag = 'scoped memory for _lambda_.1']
    #allocation5 [shape = 'u8[4096]{0}', space=vmem, size = 0x1000, scoped, tag = 'output window, operand 0, single buffered']
    %8 = vsyncpa [#allocation3], 0
    %9 = vsyncpa [#allocation4], 0
    // Predicated region
    $region2: #{_lambda_.1} parent=1 // pred_check
      _
    $region3: #{_lambda_.1} parent=1 // pred_check_branch
      %11 = sbr.rel (0) target = $region5
    $region4: #{_lambda_.1} parent=1 // pred_region
      _
    $region5: #{_lambda_.1} parent=1 // pred_fallthru
      _
    // Predicated region
    $region6: #{_lambda_.1} parent=1 // pred_check
      _
    $region7: #{_lambda_.1} parent=1 // pred_check_branch
      %13 = sbr.rel (0) target = $region9
    $region8: #{_lambda_.1} parent=1 // pred_region
      %s15 = ssub.s32 3072, 3072
      %16 = vsyncadd [#allocation3], %s15
      %s17 = sshll.u32 [#allocation2], 4
      %s18 = int_to_ptr.vmem [resolvable:$true] %s17
      %23 = dma.hbm_to_vmem [thread:$0]  %s1, 3072, %s18, [#allocation3], 64, 64, 4
    $region9: #{_lambda_.1} parent=1 // pred_fallthru
      _
    // Predicated region
    $region10: #{_lambda_.1} parent=1 // pred_check
      _
    $region11: #{_lambda_.1} parent=1 // pred_check_branch
      %25 = sbr.rel (0) target = $region13
    $region12: #{_lambda_.1} parent=1 // pred_region
      _
    $region13: #{_lambda_.1} parent=1 // pred_fallthru
      _
    // Predicated region
    $region14: #{_lambda_.1} parent=1 // pred_check
      _
    $region15: #{_lambda_.1} parent=1 // pred_check_branch
      %27 = sbr.rel (0) target = $region17
    $region16: #{_lambda_.1} parent=1 // pred_region
      %28 = dma.done [#allocation3], 3072
    $region17: #{_lambda_.1} parent=1 // pred_fallthru
      _
    %v30 = vld [vmem:[%s0] sm:$0xff]
    %v31 = vld [vmem:[#allocation2] sm:$0xf]
    %v32 = vld [vmem:[#allocation2 + $0x4] sm:$0xf]
    %v33 = vld [vmem:[#allocation2 + $0x8] sm:$0xf]
    %v34 = vld [vmem:[#allocation2 + $0xc] sm:$0xf]
    %v35 = vld [vmem:[#allocation2 + $0x10] sm:$0xf]
    %v36 = vld [vmem:[#allocation2 + $0x14] sm:$0xf]
    %v37 = vld [vmem:[#allocation2 + $0x18] sm:$0xf]
    %v38 = vld [vmem:[#allocation2 + $0x1c] sm:$0xf]
    %v39 = vld [vmem:[#allocation2 + $0x20] sm:$0xf]
    %v40 = vld [vmem:[#allocation2 + $0x24] sm:$0xf]
    %v41 = vld [vmem:[#allocation2 + $0x28] sm:$0xf]
    %v42 = vld [vmem:[#allocation2 + $0x2c] sm:$0xf]
    %v43 = vld [vmem:[#allocation2 + $0x30] sm:$0xf]
    %v44 = vld [vmem:[#allocation2 + $0x34] sm:$0xf]
    %v45 = vld [vmem:[#allocation2 + $0x38] sm:$0xf]
    %v46 = vld [vmem:[#allocation2 + $0x3c] sm:$0xf]
    %v47 = vld [vmem:[%s2] sm:$0x1]
    %v48 = vpack.c.bf16 %v30, %v30
    %v50 = vlaneseq
    %v51 = vshrl.u32 %v50, 7
    %v52 = vsub.s32 0, %v51
    %v53 = vrot.slane %v47, %v52
    %v71 = vunpack.c.l.b16 %v31
    %v72 = vunpack.c.l.b16 %v32
    %v73 = vunpack.c.l.b16 %v33
    %v74 = vunpack.c.l.b16 %v34
    %v75 = vunpack.c.l.b16 %v35
    %v76 = vunpack.c.l.b16 %v36
    %v77 = vunpack.c.l.b16 %v37
    %v78 = vunpack.c.l.b16 %v38
    %v79 = vunpack.c.l.b16 %v39
    %v80 = vunpack.c.l.b16 %v40
    %v81 = vunpack.c.l.b16 %v41
    %v82 = vunpack.c.l.b16 %v42
    %v83 = vunpack.c.l.b16 %v43
    %v84 = vunpack.c.l.b16 %v44
    %v85 = vunpack.c.l.b16 %v45
    %v86 = vunpack.c.l.b16 %v46
    %v87 = vpack.c.b16 %v72, %v71
    %v88 = vpack.c.b16 %v74, %v73
    %v89 = vpack.c.b16 %v76, %v75
    %v90 = vpack.c.b16 %v78, %v77
    %v91 = vpack.c.b16 %v80, %v79
    %v92 = vpack.c.b16 %v82, %v81
    %v93 = vpack.c.b16 %v84, %v83
    %v94 = vpack.c.b16 %v86, %v85
    %103 = vmatprep.subr.bf16.mxu0 0
    %104 = vmatpush1.bf16.msra.mxu0 %v94
    %105 = vmatprep.subr.bf16.mxu0 0
    %106 = vmatpush1.bf16.msra.mxu0 %v93
    %107 = vmatprep.subr.bf16.mxu0 0
    %108 = vmatpush1.bf16.msra.mxu0 %v92
    %109 = vmatprep.subr.bf16.mxu0 0
    %110 = vmatpush1.bf16.msra.mxu0 %v91
    %111 = vmatprep.subr.bf16.mxu0 0
    %112 = vmatpush1.bf16.msra.mxu0 %v90
    %113 = vmatprep.subr.bf16.mxu0 0
    %114 = vmatpush1.bf16.msra.mxu0 %v89
    %115 = vmatprep.subr.bf16.mxu0 0
    %116 = vmatpush1.bf16.msra.mxu0 %v88
    %117 = vmatprep.subr.bf16.mxu0 0
    %118 = vmatpush1.bf16.msra.mxu0 %v87
    %119 = vmatprep.subr.bf16.mxu0 0
    %120 = vmatpush2.bf16.msra.mxu0 0
    %121 = vmatprep.subr.bf16.mxu0 0
    %122 = vmatpush2.bf16.msra.mxu0 0
    %123 = vmatprep.subr.bf16.mxu0 0
    %124 = vmatpush2.bf16.msra.mxu0 0
    %125 = vmatprep.subr.bf16.mxu0 0
    %126 = vmatpush2.bf16.msra.mxu0 0
    %127 = vmatprep.subr.bf16.mxu0 0
    %128 = vmatpush2.bf16.msra.mxu0 0
    %129 = vmatprep.subr.bf16.mxu0 0
    %130 = vmatpush2.bf16.msra.mxu0 0
    %131 = vmatprep.subr.bf16.mxu0 0
    %132 = vmatpush2.bf16.msra.mxu0 0
    %133 = vmatprep.subr.bf16.mxu0 0
    %134 = vmatpush2.bf16.msra.mxu0 0
    %135 = vmatprep.mubr.bf16.mxu0 0
    %136 = vmatmul.mubr.bf16.gmra.mxu0 %v48
    %v137 = vpop.f32.mrf.mxu0
    %v138 = vadd.f32 %v53, %v137
    %v139 = vpop.f32.mrf.mxu0
    %v140 = vpop.f32.mrf.mxu0
    %v141 = vpop.f32.mrf.mxu0
    %142 = vdwg.mxu0
    %v143 = vmax.f32 %v138, 0.0
    %s144 = scalar_lea.vmem [#allocation2], 64
    %v145 = vld [vmem:[%s144] sm:$0xf]
    %v146 = vld [vmem:[%s144 + $0x4] sm:$0xf]
    %v147 = vld [vmem:[%s144 + $0x8] sm:$0xf]
    %v148 = vld [vmem:[%s144 + $0xc] sm:$0xf]
    %v149 = vld [vmem:[%s144 + $0x10] sm:$0xf]
    %v150 = vld [vmem:[%s144 + $0x14] sm:$0xf]
    %v151 = vld [vmem:[%s144 + $0x18] sm:$0xf]
    %v152 = vld [vmem:[%s144 + $0x1c] sm:$0xf]
    %v153 = vld [vmem:[%s144 + $0x20] sm:$0xf]
    %v154 = vld [vmem:[%s144 + $0x24] sm:$0xf]
    %v155 = vld [vmem:[%s144 + $0x28] sm:$0xf]
    %v156 = vld [vmem:[%s144 + $0x2c] sm:$0xf]
    %v157 = vld [vmem:[%s144 + $0x30] sm:$0xf]
    %v158 = vld [vmem:[%s144 + $0x34] sm:$0xf]
    %v159 = vld [vmem:[%s144 + $0x38] sm:$0xf]
    %v160 = vld [vmem:[%s144 + $0x3c] sm:$0xf]
    %s161 = scalar_lea.vmem %s2, 1
    %v162 = vld [vmem:[%s161] sm:$0x1]
    %v163 = vpack.c.bf16 %v143, %v143
    %v165 = vlaneseq
    %v166 = vshrl.u32 %v165, 7
    %v167 = vsub.s32 0, %v166
    %v168 = vrot.slane %v162, %v167
    %v186 = vunpack.c.l.b16 %v145
    %v187 = vunpack.c.l.b16 %v146
    %v188 = vunpack.c.l.b16 %v147
    %v189 = vunpack.c.l.b16 %v148
    %v190 = vunpack.c.l.b16 %v149
    %v191 = vunpack.c.l.b16 %v150
    %v192 = vunpack.c.l.b16 %v151
    %v193 = vunpack.c.l.b16 %v152
    %v194 = vunpack.c.l.b16 %v153
    %v195 = vunpack.c.l.b16 %v154
    %v196 = vunpack.c.l.b16 %v155
    %v197 = vunpack.c.l.b16 %v156
    %v198 = vunpack.c.l.b16 %v157
    %v199 = vunpack.c.l.b16 %v158
    %v200 = vunpack.c.l.b16 %v159
    %v201 = vunpack.c.l.b16 %v160
    %v202 = vpack.c.b16 %v187, %v186
    %v203 = vpack.c.b16 %v189, %v188
    %v204 = vpack.c.b16 %v191, %v190
    %v205 = vpack.c.b16 %v193, %v192
    %v206 = vpack.c.b16 %v195, %v194
    %v207 = vpack.c.b16 %v197, %v196
    %v208 = vpack.c.b16 %v199, %v198
    %v209 = vpack.c.b16 %v201, %v200
    %218 = vmatprep.subr.bf16.mxu0 0
    %219 = vmatpush1.bf16.msra.mxu0 %v209
    %220 = vmatprep.subr.bf16.mxu0 0
    %221 = vmatpush1.bf16.msra.mxu0 %v208
    %222 = vmatprep.subr.bf16.mxu0 0
    %223 = vmatpush1.bf16.msra.mxu0 %v207
    %224 = vmatprep.subr.bf16.mxu0 0
    %225 = vmatpush1.bf16.msra.mxu0 %v206
    %226 = vmatprep.subr.bf16.mxu0 0
    %227 = vmatpush1.bf16.msra.mxu0 %v205
    %228 = vmatprep.subr.bf16.mxu0 0
    %229 = vmatpush1.bf16.msra.mxu0 %v204
    %230 = vmatprep.subr.bf16.mxu0 0
    %231 = vmatpush1.bf16.msra.mxu0 %v203
    %232 = vmatprep.subr.bf16.mxu0 0
    %233 = vmatpush1.bf16.msra.mxu0 %v202
    %234 = vmatprep.subr.bf16.mxu0 0
    %235 = vmatpush2.bf16.msra.mxu0 0
    %236 = vmatprep.subr.bf16.mxu0 0
    %237 = vmatpush2.bf16.msra.mxu0 0
    %238 = vmatprep.subr.bf16.mxu0 0
    %239 = vmatpush2.bf16.msra.mxu0 0
    %240 = vmatprep.subr.bf16.mxu0 0
    %241 = vmatpush2.bf16.msra.mxu0 0
    %242 = vmatprep.subr.bf16.mxu0 0
    %243 = vmatpush2.bf16.msra.mxu0 0
    %244 = vmatprep.subr.bf16.mxu0 0
    %245 = vmatpush2.bf16.msra.mxu0 0
    %246 = vmatprep.subr.bf16.mxu0 0
    %247 = vmatpush2.bf16.msra.mxu0 0
    %248 = vmatprep.subr.bf16.mxu0 0
    %249 = vmatpush2.bf16.msra.mxu0 0
    %250 = vmatprep.mubr.bf16.mxu0 0
    %251 = vmatmul.mubr.bf16.gmra.mxu0 %v163
    %v252 = vpop.f32.mrf.mxu0
    %v253 = vadd.f32 %v168, %v252
    %v254 = vpop.f32.mrf.mxu0
    %v255 = vpop.f32.mrf.mxu0
    %v256 = vpop.f32.mrf.mxu0
    %257 = vdwg.mxu0
    %v258 = vmax.f32 %v253, 0.0
    %s259 = scalar_lea.vmem [#allocation2], 128
    %v260 = vld [vmem:[%s259] sm:$0xf]
    %v261 = vld [vmem:[%s259 + $0x4] sm:$0xf]
    %v262 = vld [vmem:[%s259 + $0x8] sm:$0xf]
    %v263 = vld [vmem:[%s259 + $0xc] sm:$0xf]
    %v264 = vld [vmem:[%s259 + $0x10] sm:$0xf]
    %v265 = vld [vmem:[%s259 + $0x14] sm:$0xf]
    %v266 = vld [vmem:[%s259 + $0x18] sm:$0xf]
    %v267 = vld [vmem:[%s259 + $0x1c] sm:$0xf]
    %v268 = vld [vmem:[%s259 + $0x20] sm:$0xf]
    %v269 = vld [vmem:[%s259 + $0x24] sm:$0xf]
    %v270 = vld [vmem:[%s259 + $0x28] sm:$0xf]
    %v271 = vld [vmem:[%s259 + $0x2c] sm:$0xf]
    %v272 = vld [vmem:[%s259 + $0x30] sm:$0xf]
    %v273 = vld [vmem:[%s259 + $0x34] sm:$0xf]
    %v274 = vld [vmem:[%s259 + $0x38] sm:$0xf]
    %v275 = vld [vmem:[%s259 + $0x3c] sm:$0xf]
    %s276 = scalar_lea.vmem %s2, 2
    %v277 = vld [vmem:[%s276] sm:$0x1]
    %v278 = vpack.c.bf16 %v258, %v258
    %v280 = vlaneseq
    %v281 = vshrl.u32 %v280, 7
    %v282 = vsub.s32 0, %v281
    %v283 = vrot.slane %v277, %v282
    %v301 = vunpack.c.l.b16 %v260
    %v302 = vunpack.c.l.b16 %v261
    %v303 = vunpack.c.l.b16 %v262
    %v304 = vunpack.c.l.b16 %v263
    %v305 = vunpack.c.l.b16 %v264
    %v306 = vunpack.c.l.b16 %v265
    %v307 = vunpack.c.l.b16 %v266
    %v308 = vunpack.c.l.b16 %v267
    %v309 = vunpack.c.l.b16 %v268
    %v310 = vunpack.c.l.b16 %v269
    %v311 = vunpack.c.l.b16 %v270
    %v312 = vunpack.c.l.b16 %v271
    %v313 = vunpack.c.l.b16 %v272
    %v314 = vunpack.c.l.b16 %v273
    %v315 = vunpack.c.l.b16 %v274
    %v316 = vunpack.c.l.b16 %v275
    %v317 = vpack.c.b16 %v302, %v301
    %v318 = vpack.c.b16 %v304, %v303
    %v319 = vpack.c.b16 %v306, %v305
    %v320 = vpack.c.b16 %v308, %v307
    %v321 = vpack.c.b16 %v310, %v309
    %v322 = vpack.c.b16 %v312, %v311
    %v323 = vpack.c.b16 %v314, %v313
    %v324 = vpack.c.b16 %v316, %v315
    %333 = vmatprep.subr.bf16.mxu0 0
    %334 = vmatpush1.bf16.msra.mxu0 %v324
    %335 = vmatprep.subr.bf16.mxu0 0
    %336 = vmatpush1.bf16.msra.mxu0 %v323
    %337 = vmatprep.subr.bf16.mxu0 0
    %338 = vmatpush1.bf16.msra.mxu0 %v322
    %339 = vmatprep.subr.bf16.mxu0 0
    %340 = vmatpush1.bf16.msra.mxu0 %v321
    %341 = vmatprep.subr.bf16.mxu0 0
    %342 = vmatpush1.bf16.msra.mxu0 %v320
    %343 = vmatprep.subr.bf16.mxu0 0
    %344 = vmatpush1.bf16.msra.mxu0 %v319
    %345 = vmatprep.subr.bf16.mxu0 0
    %346 = vmatpush1.bf16.msra.mxu0 %v318
    %347 = vmatprep.subr.bf16.mxu0 0
    %348 = vmatpush1.bf16.msra.mxu0 %v317
    %349 = vmatprep.subr.bf16.mxu0 0
    %350 = vmatpush2.bf16.msra.mxu0 0
    %351 = vmatprep.subr.bf16.mxu0 0
    %352 = vmatpush2.bf16.msra.mxu0 0
    %353 = vmatprep.subr.bf16.mxu0 0
    %354 = vmatpush2.bf16.msra.mxu0 0
    %355 = vmatprep.subr.bf16.mxu0 0
    %356 = vmatpush2.bf16.msra.mxu0 0
    %357 = vmatprep.subr.bf16.mxu0 0
    %358 = vmatpush2.bf16.msra.mxu0 0
    %359 = vmatprep.subr.bf16.mxu0 0
    %360 = vmatpush2.bf16.msra.mxu0 0
    %361 = vmatprep.subr.bf16.mxu0 0
    %362 = vmatpush2.bf16.msra.mxu0 0
    %363 = vmatprep.subr.bf16.mxu0 0
    %364 = vmatpush2.bf16.msra.mxu0 0
    %365 = vmatprep.mubr.bf16.mxu0 0
    %366 = vmatmul.mubr.bf16.gmra.mxu0 %v278
    %v367 = vpop.f32.mrf.mxu0
    %v368 = vadd.f32 %v283, %v367
    %v369 = vpop.f32.mrf.mxu0
    %v370 = vpop.f32.mrf.mxu0
    %v371 = vpop.f32.mrf.mxu0
    %372 = vdwg.mxu0
    %373 = vst [vmem:[#allocation5] sm:$0xff] %v368
    // Predicated region
    $region18: #{_lambda_.1} parent=1 // pred_check
      _
    $region19: #{_lambda_.1} parent=1 // pred_check_branch
      %375 = sbr.rel (0) target = $region21
    $region20: #{_lambda_.1} parent=1 // pred_region
      %s377 = ssub.s32 128, 128
      %378 = vsyncadd [#allocation4], %s377
      %s380 = sshll.u32 [#allocation5], 4
      %s381 = int_to_ptr.vmem [resolvable:$true] %s380
      %383 = dma.vmem_to_hbm [thread:$0]  %s381, 128, %s3, [#allocation4]
    $region21: #{_lambda_.1} parent=1 // pred_fallthru
      _
    // Predicated region
    $region22: #{_lambda_.1} parent=1 // pred_check
      _
    $region23: #{_lambda_.1} parent=1 // pred_check_branch
      %385 = sbr.rel (0) target = $region25
    $region24: #{_lambda_.1} parent=1 // pred_region
      %386 = dma.done [#allocation4], 128
    $region25: #{_lambda_.1} parent=1 // pred_fallthru
      _
    %387 = vsyncpa [#allocation3], 1
    %388 = vsyncpa [#allocation4], 1

</llo_original>
